<compile_context>
chip_gen: v5e
topology: v5e:2x2
jax: 0.10.0
libtpu: 0.0.40
codegen_flags: <defaults>
</compile_context>

<pallas_src>
import functools

import jax
import jax.numpy as jnp
from jax.experimental import pallas as pl
from jax.experimental.pallas import tpu as pltpu


def _round_up(x, m):
    return ((x + m - 1) // m) * m


def _chunk_width(tl, tm):
    """Largest lane-chunk width (multiple of 128, divides tl) with tm*cw <= 128K elems."""
    cap = max(128, ((1 << 17) // max(tm, 1)) // 128 * 128)
    for cw in (2048, 1024, 512, 256, 128):
        if cw <= tl and cw <= cap and tl % cw == 0:
            return cw
    return 128


def _row_sumsq_kernel(s1_ref, s2_ref, o_ref,
                      ss1_ref, ss2_ref, q1_ref, q2_ref,
                      a1_scr, a2_scr, b1_scr, b2_scr,
                      *, tl, cw, num_j, last_valid):
    """Streaming per-row sums of squares.

    s1/s2/o refs           : (tm, tl) input tiles (auto-pipelined from HBM).
    ss*/q* refs (outputs)  : (tm, 1) f32 row sums, written only at the last HW step.
    a*/b* scr (scratch)    : (tm, 128) f32 lane-dense accumulators, persistent in VMEM.
    """
    j = pl.program_id(1)

    @pl.when(j == 0)
    def _():
        a1_scr[...] = jnp.zeros_like(a1_scr)
        a2_scr[...] = jnp.zeros_like(a2_scr)
        b1_scr[...] = jnp.zeros_like(b1_scr)
        b2_scr[...] = jnp.zeros_like(b2_scr)

    def fold128(x):
        # (tm, cw) -> (tm, 128): sum the cw//128 lane groups (VALU only, no XLU).
        p = x[:, 0:128]
        for t in range(1, cw // 128):
            p = p + x[:, t * 128:(t + 1) * 128]
        return p

    def accumulate(valids):
        # valids: static per-chunk count of valid lanes (cw = full, 0 = skip).
        for k, valid in enumerate(valids):
            if valid <= 0:
                continue
            c0 = k * cw
            s1 = s1_ref[:, c0:c0 + cw].astype(jnp.float32)
            s2 = s2_ref[:, c0:c0 + cw].astype(jnp.float32)
            o = o_ref[:, c0:c0 + cw].astype(jnp.float32)
            d1 = o - s1
            d2 = o - s2
            a1 = d1 * d1
            a2 = d2 * d2
            b1 = s1 * s1
            b2 = s2 * s2
            if valid < cw:
                # Ragged edge of the HW axis: zero contributions from garbage lanes.
                lane = jax.lax.broadcasted_iota(jnp.int32, a1.shape, 1)
                m = lane < valid
                a1 = jnp.where(m, a1, 0.0)
                a2 = jnp.where(m, a2, 0.0)
                b1 = jnp.where(m, b1, 0.0)
                b2 = jnp.where(m, b2, 0.0)
            a1_scr[...] += fold128(a1)
            a2_scr[...] += fold128(a2)
            b1_scr[...] += fold128(b1)
            b2_scr[...] += fold128(b2)

    n_chunks = tl // cw
    full = [cw] * n_chunks
    if last_valid == tl:
        accumulate(full)
    else:
        edge = [min(cw, max(0, last_valid - k * cw)) for k in range(n_chunks)]
        if num_j == 1:
            accumulate(edge)
        else:
            @pl.when(j < num_j - 1)
            def _():
                accumulate(full)

            @pl.when(j == num_j - 1)
            def _():
                accumulate(edge)

    @pl.when(j == num_j - 1)
    def _():
        ss1_ref[...] = jnp.sum(a1_scr[...], axis=-1, keepdims=True)
        ss2_ref[...] = jnp.sum(a2_scr[...], axis=-1, keepdims=True)
        q1_ref[...] = jnp.sum(b1_scr[...], axis=-1, keepdims=True)
        q2_ref[...] = jnp.sum(b2_scr[...], axis=-1, keepdims=True)


def _epilogue_kernel(ss1_ref, ss2_ref, q1_ref, q2_ref, l1_ref, l2_ref, *, hw):
    """Tiny finalize: sqrt / softmax over the two sources / weighted means.

    ss*_ref, q*_ref : (B, C) f32 row sums from the streaming kernel.
    l1_ref, l2_ref  : (1, 128) f32 VMEM outputs (loss broadcast across lanes).
    """
    ss1 = ss1_ref[...]
    ss2 = ss2_ref[...]
    q1 = q1_ref[...]
    q2 = q2_ref[...]
    b, c = ss1.shape  # static

    inv_hw = 1.0 / float(hw)
    mse1 = jnp.sqrt(ss1) * inv_hw            # (B, C)
    mse2 = jnp.sqrt(ss2) * inv_hw

    # s_k[c] = mean_b(q_k[b,c] / HW) / B  ==  sum_b q_k[b,c] / (HW * B * B)
    scale = inv_hw / float(b * b)
    w1 = jnp.sum(q1, axis=0, keepdims=True) * scale   # (1, C)
    w2 = jnp.sum(q2, axis=0, keepdims=True) * scale

    # Numerically stable softmax over the two sources, per channel.
    mx = jnp.maximum(w1, w2)
    e1 = jnp.exp(w1 - mx)
    e2 = jnp.exp(w2 - mx)
    inv_den = 1.0 / (e1 + e2)
    sm1 = e1 * inv_den                                  # (1, C)
    sm2 = e2 * inv_den

    inv_bc = 1.0 / float(b * c)
    t1 = jnp.sum(jnp.sum(sm1 * mse1, axis=1, keepdims=True), axis=0, keepdims=True) * inv_bc
    t2 = jnp.sum(jnp.sum(sm2 * mse2, axis=1, keepdims=True), axis=0, keepdims=True) * inv_bc
    l1_ref[...] = jnp.broadcast_to(t1, l1_ref.shape)
    l2_ref[...] = jnp.broadcast_to(t2, l2_ref.shape)


def adaptive_mse(source1, source2, output, *, tm_max=None, tl_max=None):
    """source1, source2, output: (B, C, H, W) arrays (NCHW). Returns (loss1, loss2) f32 scalars."""
    assert source1.shape == source2.shape == output.shape
    B, C, H, W = source1.shape
    BC, HW = B * C, H * W

    # Flatten to 2D: sublane axis = B*C rows, lane axis = pixels.
    s1 = source1.reshape(BC, HW)
    s2 = source2.reshape(BC, HW)
    out = output.reshape(BC, HW)

    itemsize = jnp.dtype(source1.dtype).itemsize
    sub = {1: 32, 2: 16}.get(itemsize, 8)   # dtype-aware sublane multiple

    try:
        vmem_cap = int(pltpu.get_tpu_info().vmem_capacity_bytes)
    except Exception:
        vmem_cap = 64 << 20                 # conservative (v7x-sized) fallback

    # Budget for 3 inputs x 2 pipeline buffers: <= 48 MiB, and <= 3/8 of physical VMEM.
    footprint = min(48 << 20, (vmem_cap * 3) // 8)
    elem_budget = max(sub * 128, (footprint // 6) // itemsize)   # elements per input tile

    # Row tile: aim for >= 4 blocks on the parallel BC axis (keeps both v7x cores fed).
    bc_ceil = _round_up(BC, sub)
    tm = max(sub, _round_up(pl.cdiv(BC, 4), sub))
    tm = min(tm, bc_ceil, 512)
    if tm_max is not None:
        tm = min(tm, max(sub, _round_up(int(tm_max), sub)))
    tm = min(tm, max(sub, (elem_budget // 128) // sub * sub))

    # Lane tile: as large as the budget allows (fewer grid steps -> less fixed overhead).
    hw_ceil = _round_up(HW, 128)
    tl = min(hw_ceil, 16384, max(128, (elem_budget // tm) // 128 * 128))
    if tl_max is not None:
        tl = min(tl, max(128, _round_up(int(tl_max), 128)))
    cw = _chunk_width(tl, tm)

    grid = (pl.cdiv(BC, tm), pl.cdiv(HW, tl))   # reduction (HW) axis last
    num_j = grid[1]
    last_valid = HW - (num_j - 1) * tl          # valid lanes in the last HW tile (static)

    in_spec = pl.BlockSpec((tm, tl), lambda i, j: (i, j))
    out_spec = pl.BlockSpec((tm, 1), lambda i, j: (i, 0))      # resident across HW axis
    out_shape = jax.ShapeDtypeStruct((BC, 1), jnp.float32)

    # VMEM limit derived from the actual footprint: pipelined inputs + scratch + headroom
    # for per-chunk elementwise temporaries.
    need = (3 * 2 * tm * tl * itemsize) + (4 * tm * 128 * 4) + (10 * tm * cw * 4)
    vmem_limit = int(min(max(need + (4 << 20), 16 << 20), 100 << 20))

    kernel = functools.partial(_row_sumsq_kernel, tl=tl, cw=cw,
                               num_j=num_j, last_valid=last_valid)
    ss1, ss2, q1, q2 = pl.pallas_call(
        kernel,
        grid=grid,
        in_specs=[in_spec, in_spec, in_spec],
        out_specs=(out_spec, out_spec, out_spec, out_spec),
        out_shape=(out_shape, out_shape, out_shape, out_shape),
        scratch_shapes=[pltpu.VMEM((tm, 128), jnp.float32)] * 4,
        compiler_params=pltpu.CompilerParams(
            dimension_semantics=("parallel", "arbitrary"),
            vmem_limit_bytes=vmem_limit,
        ),
    )(s1, s2, out)

    # Contiguous (free) reshapes only -- no slicing of padded rows needed.
    ss1 = ss1.reshape(B, C)
    ss2 = ss2.reshape(B, C)
    q1 = q1.reshape(B, C)
    q2 = q2.reshape(B, C)

    vmem_spec = pl.BlockSpec(memory_space=pltpu.MemorySpace.VMEM)
    l1, l2 = pl.pallas_call(
        functools.partial(_epilogue_kernel, hw=HW),
        out_shape=(jax.ShapeDtypeStruct((1, 128), jnp.float32),
                   jax.ShapeDtypeStruct((1, 128), jnp.float32)),
        in_specs=[vmem_spec] * 4,
        out_specs=(vmem_spec, vmem_spec),
    )(ss1, ss2, q1, q2)
    return l1[0, 0], l2[0, 0]


def adaptive_mse_reference(source1, source2, output):
    """Pure-JAX reference mirroring the PyTorch module."""
    B, C, H, W = source1.shape

    def fro(x):
        return jnp.sqrt(jnp.sum(x * x, axis=(2, 3))) / (H * W)  # (B, C)

    mse1 = fro(output - source1)
    mse2 = fro(output - source2)
    m1 = jnp.mean(source1 ** 2, axis=(2, 3))   # (B, C)
    m2 = jnp.mean(source2 ** 2, axis=(2, 3))   # (B, C)
    s1 = jnp.mean(m1, axis=0) / B              # (C,)  (double division matches the module)
    s2 = jnp.mean(m2, axis=0) / B              # (C,)
    s = jax.nn.softmax(jnp.stack([s1, s2], axis=-1), axis=-1)  # (C, 2)
    return jnp.mean(s[:, 0] * mse1), jnp.mean(s[:, 1] * mse2)


def _check(shape, key, **kwargs):
    k1, k2, k3 = jax.random.split(key, 3)
    source1 = jax.random.normal(k1, shape, dtype=jnp.float32)
    source2 = jax.random.normal(k2, shape, dtype=jnp.float32)
    output = jax.random.normal(k3, shape, dtype=jnp.float32)

    loss1, loss2 = adaptive_mse(source1, source2, output, **kwargs)
    loss1 = jax.block_until_ready(loss1)
    loss2 = jax.block_until_ready(loss2)

    ref1, ref2 = adaptive_mse_reference(source1, source2, output)
    assert jnp.allclose(loss1, ref1, rtol=1e-4, atol=1e-6), (shape, loss1, ref1)
    assert jnp.allclose(loss2, ref2, rtol=1e-4, atol=1e-6), (shape, loss2, ref2)


if __name__ == "__main__":
    key = jax.random.PRNGKey(0)
    ks = jax.random.split(key, 4)

    # Primary small case: single aligned tile.
    _check((2, 4, 16, 16), ks[0])
    # Force a multi-tile (parallel x arbitrary) grid to exercise the accumulation path.
    _check((4, 6, 16, 16), ks[1], tm_max=8, tl_max=128)
    # Ragged rows (BC=6) and ragged lanes (HW=100): exercises the in-kernel masking path.
    _check((2, 3, 10, 10), ks[2])
    # Multi-step reduction with a ragged last HW tile (pl.when full/edge split).
    _check((2, 4, 18, 18), ks[3], tm_max=8, tl_max=128)

    print("KERNEL_OK")
</pallas_src>

<mosaic_0001>
module attributes {stable_mosaic.version = 11 : i64} {
  func.func @_row_sumsq_kernel(%arg0: i32, %arg1: i32, %arg2: memref<8x256xf32, #tpu.memory_space<vmem>>, %arg3: memref<8x256xf32, #tpu.memory_space<vmem>>, %arg4: memref<8x256xf32, #tpu.memory_space<vmem>>, %arg5: memref<8x1xf32, #tpu.memory_space<vmem>>, %arg6: memref<8x1xf32, #tpu.memory_space<vmem>>, %arg7: memref<8x1xf32, #tpu.memory_space<vmem>>, %arg8: memref<8x1xf32, #tpu.memory_space<vmem>>, %arg9: memref<8x128xf32, #tpu.memory_space<vmem>>, %arg10: memref<8x128xf32, #tpu.memory_space<vmem>>, %arg11: memref<8x128xf32, #tpu.memory_space<vmem>>, %arg12: memref<8x128xf32, #tpu.memory_space<vmem>>) attributes {dimension_semantics = [#tpu.dimension_semantics<parallel>, #tpu.dimension_semantics<arbitrary>], iteration_bounds = array<i64: 1, 1>, scalar_prefetch = 0 : i64, scratch_operands = 4 : i64, tpu.core_type = #tpu.core_type<tc>, window_params = [{transform_indices = @transform_0, window_bounds = array<i64: 8, 256>}, {transform_indices = @transform_1, window_bounds = array<i64: 8, 256>}, {transform_indices = @transform_2, window_bounds = array<i64: 8, 256>}, {transform_indices = @transform_3, window_bounds = array<i64: 8, 1>}, {transform_indices = @transform_4, window_bounds = array<i64: 8, 1>}, {transform_indices = @transform_5, window_bounds = array<i64: 8, 1>}, {transform_indices = @transform_6, window_bounds = array<i64: 8, 1>}]} {
    %c0_i32 = arith.constant 0 : i32
    %0 = arith.cmpi eq, %arg1, %c0_i32 : i32
    %1 = arith.extui %0 : i1 to i32
    %c0_i32_0 = arith.constant 0 : i32
    %2 = arith.cmpi ne, %1, %c0_i32_0 : i32
    scf.if %2 {
      %cst = arith.constant 0.000000e+00 : f32
      %39 = vector.broadcast %cst : f32 to vector<8x128xf32>
      %c0_24 = arith.constant 0 : index
      %c0_25 = arith.constant 0 : index
      %40 = vector.load %arg9[%c0_24, %c0_25] : memref<8x128xf32, #tpu.memory_space<vmem>>, vector<8x128xf32>
      tpu.vector_store %arg9[%c0_24, %c0_25], %39 {strides = array<i32>} : memref<8x128xf32, #tpu.memory_space<vmem>>, vector<8x128xf32>,
      %cst_26 = arith.constant 0.000000e+00 : f32
      %41 = vector.broadcast %cst_26 : f32 to vector<8x128xf32>
      %c0_27 = arith.constant 0 : index
      %c0_28 = arith.constant 0 : index
      %42 = vector.load %arg10[%c0_27, %c0_28] : memref<8x128xf32, #tpu.memory_space<vmem>>, vector<8x128xf32>
      tpu.vector_store %arg10[%c0_27, %c0_28], %41 {strides = array<i32>} : memref<8x128xf32, #tpu.memory_space<vmem>>, vector<8x128xf32>,
      %cst_29 = arith.constant 0.000000e+00 : f32
      %43 = vector.broadcast %cst_29 : f32 to vector<8x128xf32>
      %c0_30 = arith.constant 0 : index
      %c0_31 = arith.constant 0 : index
      %44 = vector.load %arg11[%c0_30, %c0_31] : memref<8x128xf32, #tpu.memory_space<vmem>>, vector<8x128xf32>
      tpu.vector_store %arg11[%c0_30, %c0_31], %43 {strides = array<i32>} : memref<8x128xf32, #tpu.memory_space<vmem>>, vector<8x128xf32>,
      %cst_32 = arith.constant 0.000000e+00 : f32
      %45 = vector.broadcast %cst_32 : f32 to vector<8x128xf32>
      %c0_33 = arith.constant 0 : index
      %c0_34 = arith.constant 0 : index
      %46 = vector.load %arg12[%c0_33, %c0_34] : memref<8x128xf32, #tpu.memory_space<vmem>>, vector<8x128xf32>
      tpu.vector_store %arg12[%c0_33, %c0_34], %45 {strides = array<i32>} : memref<8x128xf32, #tpu.memory_space<vmem>>, vector<8x128xf32>,
    } else {
    }
    %c0 = arith.constant 0 : index
    %c0_1 = arith.constant 0 : index
    %3 = vector.load %arg2[%c0, %c0_1] : memref<8x256xf32, #tpu.memory_space<vmem>>, vector<8x256xf32>
    %c0_2 = arith.constant 0 : index
    %c0_3 = arith.constant 0 : index
    %4 = vector.load %arg3[%c0_2, %c0_3] : memref<8x256xf32, #tpu.memory_space<vmem>>, vector<8x256xf32>
    %c0_4 = arith.constant 0 : index
    %c0_5 = arith.constant 0 : index
    %5 = vector.load %arg4[%c0_4, %c0_5] : memref<8x256xf32, #tpu.memory_space<vmem>>, vector<8x256xf32>
    %6 = arith.subf %5, %3 : vector<8x256xf32>
    %7 = arith.subf %5, %4 : vector<8x256xf32>
    %8 = arith.mulf %6, %6 : vector<8x256xf32>
    %9 = arith.mulf %7, %7 : vector<8x256xf32>
    %10 = arith.mulf %3, %3 : vector<8x256xf32>
    %11 = arith.mulf %4, %4 : vector<8x256xf32>
    %c0_6 = arith.constant 0 : index
    %c0_7 = arith.constant 0 : index
    %12 = vector.load %arg9[%c0_6, %c0_7] : memref<8x128xf32, #tpu.memory_space<vmem>>, vector<8x128xf32>
    %13 = vector.extract_strided_slice %8 {offsets = [0, 0], sizes = [8, 128], strides = [1, 1]} : vector<8x256xf32> to vector<8x128xf32>
    %14 = vector.extract_strided_slice %8 {offsets = [0, 128], sizes = [8, 128], strides = [1, 1]} : vector<8x256xf32> to vector<8x128xf32>
    %15 = arith.addf %13, %14 : vector<8x128xf32>
    %16 = arith.addf %12, %15 : vector<8x128xf32>
    %c0_8 = arith.constant 0 : index
    %c0_9 = arith.constant 0 : index
    %17 = vector.load %arg9[%c0_8, %c0_9] : memref<8x128xf32, #tpu.memory_space<vmem>>, vector<8x128xf32>
    tpu.vector_store %arg9[%c0_8, %c0_9], %16 {strides = array<i32>} : memref<8x128xf32, #tpu.memory_space<vmem>>, vector<8x128xf32>,
    %c0_10 = arith.constant 0 : index
    %c0_11 = arith.constant 0 : index
    %18 = vector.load %arg10[%c0_10, %c0_11] : memref<8x128xf32, #tpu.memory_space<vmem>>, vector<8x128xf32>
    %19 = vector.extract_strided_slice %9 {offsets = [0, 0], sizes = [8, 128], strides = [1, 1]} : vector<8x256xf32> to vector<8x128xf32>
    %20 = vector.extract_strided_slice %9 {offsets = [0, 128], sizes = [8, 128], strides = [1, 1]} : vector<8x256xf32> to vector<8x128xf32>
    %21 = arith.addf %19, %20 : vector<8x128xf32>
    %22 = arith.addf %18, %21 : vector<8x128xf32>
    %c0_12 = arith.constant 0 : index
    %c0_13 = arith.constant 0 : index
    %23 = vector.load %arg10[%c0_12, %c0_13] : memref<8x128xf32, #tpu.memory_space<vmem>>, vector<8x128xf32>
    tpu.vector_store %arg10[%c0_12, %c0_13], %22 {strides = array<i32>} : memref<8x128xf32, #tpu.memory_space<vmem>>, vector<8x128xf32>,
    %c0_14 = arith.constant 0 : index
    %c0_15 = arith.constant 0 : index
    %24 = vector.load %arg11[%c0_14, %c0_15] : memref<8x128xf32, #tpu.memory_space<vmem>>, vector<8x128xf32>
    %25 = vector.extract_strided_slice %10 {offsets = [0, 0], sizes = [8, 128], strides = [1, 1]} : vector<8x256xf32> to vector<8x128xf32>
    %26 = vector.extract_strided_slice %10 {offsets = [0, 128], sizes = [8, 128], strides = [1, 1]} : vector<8x256xf32> to vector<8x128xf32>
    %27 = arith.addf %25, %26 : vector<8x128xf32>
    %28 = arith.addf %24, %27 : vector<8x128xf32>
    %c0_16 = arith.constant 0 : index
    %c0_17 = arith.constant 0 : index
    %29 = vector.load %arg11[%c0_16, %c0_17] : memref<8x128xf32, #tpu.memory_space<vmem>>, vector<8x128xf32>
    tpu.vector_store %arg11[%c0_16, %c0_17], %28 {strides = array<i32>} : memref<8x128xf32, #tpu.memory_space<vmem>>, vector<8x128xf32>,
    %c0_18 = arith.constant 0 : index
    %c0_19 = arith.constant 0 : index
    %30 = vector.load %arg12[%c0_18, %c0_19] : memref<8x128xf32, #tpu.memory_space<vmem>>, vector<8x128xf32>
    %31 = vector.extract_strided_slice %11 {offsets = [0, 0], sizes = [8, 128], strides = [1, 1]} : vector<8x256xf32> to vector<8x128xf32>
    %32 = vector.extract_strided_slice %11 {offsets = [0, 128], sizes = [8, 128], strides = [1, 1]} : vector<8x256xf32> to vector<8x128xf32>
    %33 = arith.addf %31, %32 : vector<8x128xf32>
    %34 = arith.addf %30, %33 : vector<8x128xf32>
    %c0_20 = arith.constant 0 : index
    %c0_21 = arith.constant 0 : index
    %35 = vector.load %arg12[%c0_20, %c0_21] : memref<8x128xf32, #tpu.memory_space<vmem>>, vector<8x128xf32>
    tpu.vector_store %arg12[%c0_20, %c0_21], %34 {strides = array<i32>} : memref<8x128xf32, #tpu.memory_space<vmem>>, vector<8x128xf32>,
    %c0_i32_22 = arith.constant 0 : i32
    %36 = arith.cmpi eq, %arg1, %c0_i32_22 : i32
    %37 = arith.extui %36 : i1 to i32
    %c0_i32_23 = arith.constant 0 : i32
    %38 = arith.cmpi ne, %37, %c0_i32_23 : i32
    scf.if %38 {
      %c0_24 = arith.constant 0 : index
      %c0_25 = arith.constant 0 : index
      %39 = vector.load %arg9[%c0_24, %c0_25] : memref<8x128xf32, #tpu.memory_space<vmem>>, vector<8x128xf32>
      %cst = arith.constant dense<0.000000e+00> : vector<8xf32>
      %40 = vector.multi_reduction <add>, %39, %cst [1] : vector<8x128xf32> to vector<8xf32>
      %41 = vector.shape_cast %40 : vector<8xf32> to vector<8x1xf32>
      %c0_26 = arith.constant 0 : index
      %c0_27 = arith.constant 0 : index
      %42 = vector.load %arg5[%c0_26, %c0_27] : memref<8x1xf32, #tpu.memory_space<vmem>>, vector<8x1xf32>
      tpu.vector_store %arg5[%c0_26, %c0_27], %41 {strides = array<i32>} : memref<8x1xf32, #tpu.memory_space<vmem>>, vector<8x1xf32>,
      %c0_28 = arith.constant 0 : index
      %c0_29 = arith.constant 0 : index
      %43 = vector.load %arg10[%c0_28, %c0_29] : memref<8x128xf32, #tpu.memory_space<vmem>>, vector<8x128xf32>
      %cst_30 = arith.constant dense<0.000000e+00> : vector<8xf32>
      %44 = vector.multi_reduction <add>, %43, %cst_30 [1] : vector<8x128xf32> to vector<8xf32>
      %45 = vector.shape_cast %44 : vector<8xf32> to vector<8x1xf32>
      %c0_31 = arith.constant 0 : index
      %c0_32 = arith.constant 0 : index
      %46 = vector.load %arg6[%c0_31, %c0_32] : memref<8x1xf32, #tpu.memory_space<vmem>>, vector<8x1xf32>
      tpu.vector_store %arg6[%c0_31, %c0_32], %45 {strides = array<i32>} : memref<8x1xf32, #tpu.memory_space<vmem>>, vector<8x1xf32>,
      %c0_33 = arith.constant 0 : index
      %c0_34 = arith.constant 0 : index
      %47 = vector.load %arg11[%c0_33, %c0_34] : memref<8x128xf32, #tpu.memory_space<vmem>>, vector<8x128xf32>
      %cst_35 = arith.constant dense<0.000000e+00> : vector<8xf32>
      %48 = vector.multi_reduction <add>, %47, %cst_35 [1] : vector<8x128xf32> to vector<8xf32>
      %49 = vector.shape_cast %48 : vector<8xf32> to vector<8x1xf32>
      %c0_36 = arith.constant 0 : index
      %c0_37 = arith.constant 0 : index
      %50 = vector.load %arg7[%c0_36, %c0_37] : memref<8x1xf32, #tpu.memory_space<vmem>>, vector<8x1xf32>
      tpu.vector_store %arg7[%c0_36, %c0_37], %49 {strides = array<i32>} : memref<8x1xf32, #tpu.memory_space<vmem>>, vector<8x1xf32>,
      %c0_38 = arith.constant 0 : index
      %c0_39 = arith.constant 0 : index
      %51 = vector.load %arg12[%c0_38, %c0_39] : memref<8x128xf32, #tpu.memory_space<vmem>>, vector<8x128xf32>
      %cst_40 = arith.constant dense<0.000000e+00> : vector<8xf32>
      %52 = vector.multi_reduction <add>, %51, %cst_40 [1] : vector<8x128xf32> to vector<8xf32>
      %53 = vector.shape_cast %52 : vector<8xf32> to vector<8x1xf32>
      %c0_41 = arith.constant 0 : index
      %c0_42 = arith.constant 0 : index
      %54 = vector.load %arg8[%c0_41, %c0_42] : memref<8x1xf32, #tpu.memory_space<vmem>>, vector<8x1xf32>
      tpu.vector_store %arg8[%c0_41, %c0_42], %53 {strides = array<i32>} : memref<8x1xf32, #tpu.memory_space<vmem>>, vector<8x1xf32>,
    } else {
    }
    return
  }
  func.func @transform_0(%arg0: i32, %arg1: i32) -> (i32, i32) {
    %c0_i32 = arith.constant 0 : i32
    return %arg0, %arg1 : i32, i32
  }
  func.func @transform_1(%arg0: i32, %arg1: i32) -> (i32, i32) {
    %c0_i32 = arith.constant 0 : i32
    return %arg0, %arg1 : i32, i32
  }
  func.func @transform_2(%arg0: i32, %arg1: i32) -> (i32, i32) {
    %c0_i32 = arith.constant 0 : i32
    return %arg0, %arg1 : i32, i32
  }
  func.func @transform_3(%arg0: i32, %arg1: i32) -> (i32, i32) {
    %c0_i32 = arith.constant 0 : i32
    %c0_i32_0 = arith.constant 0 : i32
    return %arg0, %c0_i32 : i32, i32
  }
  func.func @transform_4(%arg0: i32, %arg1: i32) -> (i32, i32) {
    %c0_i32 = arith.constant 0 : i32
    %c0_i32_0 = arith.constant 0 : i32
    return %arg0, %c0_i32 : i32, i32
  }
  func.func @transform_5(%arg0: i32, %arg1: i32) -> (i32, i32) {
    %c0_i32 = arith.constant 0 : i32
    %c0_i32_0 = arith.constant 0 : i32
    return %arg0, %c0_i32 : i32, i32
  }
  func.func @transform_6(%arg0: i32, %arg1: i32) -> (i32, i32) {
    %c0_i32 = arith.constant 0 : i32
    %c0_i32_0 = arith.constant 0 : i32
    return %arg0, %c0_i32 : i32, i32
  }
}

</mosaic_0001>

<llo_original>
// kernel: tpu_custom_call.1
$region0: #{tpu_custom_call.1}
  #allocation0 [shape = 'u32[]', space=smem, size = 0x4, offset = 0x4, fixed_abs, tag = 'smem constant byte address 0x4 - core index']
  #allocation1 [shape = 'u32[72,128]{1,0:T(1,128)}', space=vmem, size = 0x9000, scoped, tag = 'internal scratch']
  #allocation2 [shape = 'f32[8,128]{1,0:T(8,128)}', space=vmem, size = 0x1000, scoped, tag = 'scratch operand']
  #allocation3 [shape = 'f32[8,128]{1,0:T(8,128)}', space=vmem, size = 0x1000, scoped, tag = 'scratch operand']
  #allocation4 [shape = 'f32[8,128]{1,0:T(8,128)}', space=vmem, size = 0x1000, scoped, tag = 'scratch operand']
  #allocation5 [shape = 'f32[8,128]{1,0:T(8,128)}', space=vmem, size = 0x1000, scoped, tag = 'scratch operand']
  %s0 = inlined_call_operand.hbm [shape: f32[8,256], index: 0, kind: input, shape index: {}]
  %s1 = inlined_call_operand.hbm [shape: f32[8,256], index: 1, kind: input, shape index: {}]
  %s2 = inlined_call_operand.hbm [shape: f32[8,256], index: 2, kind: input, shape index: {}]
  %s3 = inlined_call_operand.vmem [shape: f32[8,1], index: 3, kind: output, shape index: {0}]
  %s4 = inlined_call_operand.vmem [shape: f32[8,1], index: 4, kind: output, shape index: {1}]
  %s5 = inlined_call_operand.vmem [shape: f32[8,1], index: 5, kind: output, shape index: {2}]
  %s6 = inlined_call_operand.vmem [shape: f32[8,1], index: 6, kind: output, shape index: {3}]
  %7 = xla_tuple %s3, %s4, %s5, %s6
  %s8 = sld [smem:[#allocation0]]
  $region66: #{tpu_custom_call.1} parent=0
    _
  %s10 = ssub.s32 1, %s8
  %s11 = scalar_select 0, %s10, %s8
  $region1: #{tpu_custom_call.1} parent=0
    #allocation6 [shape = 'u8[8192]{0}', space=vmem, size = 0x2000, scoped, tag = 'input window, operand 0, single buffered']
    #allocation7 [shape = 's32[1]{0}', space=sflag, size = 0x4, scoped, tag = 'scoped memory for tpu_custom_call.1']
    #allocation8 [shape = 'u8[8192]{0}', space=vmem, size = 0x2000, scoped, tag = 'input window, operand 1, single buffered']
    #allocation9 [shape = 's32[1]{0}', space=sflag, size = 0x4, scoped, tag = 'scoped memory for tpu_custom_call.1']
    #allocation10 [shape = 'u8[8192]{0}', space=vmem, size = 0x2000, scoped, tag = 'input window, operand 2, single buffered']
    %12 = vsyncpa [#allocation7], 0
    %13 = vsyncpa [#allocation9], 0
    // Predicated region
    $region2: #{tpu_custom_call.1} parent=1 // pred_check
      _
    $region3: #{tpu_custom_call.1} parent=1 // pred_check_branch
      %15 = sbr.rel (0) target = $region5
    $region4: #{tpu_custom_call.1} parent=1 // pred_region
      %17 = vsyncadd [#allocation7], 0
      %s19 = sshll.u32 %s0, 4
      %s20 = int_to_ptr.hbm [resolvable:$true] %s19
      %s21 = sshll.u32 [#allocation6], 4
      %s22 = int_to_ptr.vmem [resolvable:$true] %s21
      %24 = dma.hbm_to_vmem [thread:$0]  %s20, 256, %s22, [#allocation7]
    $region5: #{tpu_custom_call.1} parent=1 // pred_fallthru
      _
    // Predicated region
    $region6: #{tpu_custom_call.1} parent=1 // pred_check
      _
    $region7: #{tpu_custom_call.1} parent=1 // pred_check_branch
      %26 = sbr.rel (0) target = $region9
    $region8: #{tpu_custom_call.1} parent=1 // pred_region
      %28 = vsyncadd [#allocation9], 0
      %s30 = sshll.u32 %s1, 4
      %s31 = int_to_ptr.hbm [resolvable:$true] %s30
      %s32 = sshll.u32 [#allocation8], 4
      %s33 = int_to_ptr.vmem [resolvable:$true] %s32
      %35 = dma.hbm_to_vmem [thread:$0]  %s31, 256, %s33, [#allocation9]
    $region9: #{tpu_custom_call.1} parent=1 // pred_fallthru
      _
    // Predicated region
    $region10: #{tpu_custom_call.1} parent=1 // pred_check
      _
    $region11: #{tpu_custom_call.1} parent=1 // pred_check_branch
      %37 = sbr.rel (0) target = $region13
    $region12: #{tpu_custom_call.1} parent=1 // pred_region
      %39 = vsyncadd [#allocation9], 0
      %s41 = sshll.u32 %s2, 4
      %s42 = int_to_ptr.hbm [resolvable:$true] %s41
      %s43 = sshll.u32 [#allocation10], 4
      %s44 = int_to_ptr.vmem [resolvable:$true] %s43
      %46 = dma.hbm_to_vmem [thread:$0]  %s42, 256, %s44, [#allocation9]
    $region13: #{tpu_custom_call.1} parent=1 // pred_fallthru
      _
    // Predicated region
    $region14: #{tpu_custom_call.1} parent=1 // pred_check
      _
    $region15: #{tpu_custom_call.1} parent=1 // pred_check_branch
      %48 = sbr.rel (0) target = $region17
    $region16: #{tpu_custom_call.1} parent=1 // pred_region
      %50 = dma.done [#allocation7], 256
    $region17: #{tpu_custom_call.1} parent=1 // pred_fallthru
      _
    // Predicated region
    $region18: #{tpu_custom_call.1} parent=1 // pred_check
      _
    $region19: #{tpu_custom_call.1} parent=1 // pred_check_branch
      %52 = sbr.rel (0) target = $region21
    $region20: #{tpu_custom_call.1} parent=1 // pred_region
      %54 = dma.done [#allocation9], 256
    $region21: #{tpu_custom_call.1} parent=1 // pred_fallthru
      _
    // Predicated region
    $region22: #{tpu_custom_call.1} parent=1 // pred_check
      _
    $region23: #{tpu_custom_call.1} parent=1 // pred_check_branch
      %56 = sbr.rel (0) target = $region25
    $region24: #{tpu_custom_call.1} parent=1 // pred_region
      %58 = dma.done [#allocation9], 256
    $region25: #{tpu_custom_call.1} parent=1 // pred_fallthru
      _
    %p59 = scmp.eq.s32.totalorder 0, 0
    // Predicated region
    $region26: #{tpu_custom_call.1} parent=1 // pred_check
      %p60 = pneg %p59
    $region27: #{tpu_custom_call.1} parent=1 // pred_check_branch
      %62 = sbr.rel (%p60) target = $region29
    $region28: #{tpu_custom_call.1} parent=1 // pred_region
      %63 = vst [vmem:[#allocation2] sm:$0xff] 0.0
      %64 = vst [vmem:[#allocation3] sm:$0xff] 0.0
      %65 = vst [vmem:[#allocation4] sm:$0xff] 0.0
      %66 = vst [vmem:[#allocation5] sm:$0xff] 0.0
    $region29: #{tpu_custom_call.1} parent=1 // pred_fallthru
      _
    %v67 = vld [vmem:[#allocation6] sm:$0xff]
    %v68 = vld [vmem:[#allocation6 + $0x8] sm:$0xff]
    %v69 = vld [vmem:[#allocation8] sm:$0xff]
    %v70 = vld [vmem:[#allocation8 + $0x8] sm:$0xff]
    %v71 = vld [vmem:[#allocation10] sm:$0xff]
    %v72 = vld [vmem:[#allocation10 + $0x8] sm:$0xff]
    %v73 = vsub.f32 %v71, %v67
    %v74 = vsub.f32 %v72, %v68
    %v75 = vsub.f32 %v71, %v69
    %v76 = vsub.f32 %v72, %v70
    %v77 = vmul.f32 %v73, %v73
    %v78 = vmul.f32 %v74, %v74
    %v79 = vmul.f32 %v75, %v75
    %v80 = vmul.f32 %v76, %v76
    %v81 = vmul.f32 %v67, %v67
    %v82 = vmul.f32 %v68, %v68
    %v83 = vmul.f32 %v69, %v69
    %v84 = vmul.f32 %v70, %v70
    %v85 = vld [vmem:[#allocation2] sm:$0xff]
    %v86 = vadd.f32 %v77, %v78
    %v87 = vadd.f32 %v85, %v86
    %88 = vst [vmem:[#allocation2] sm:$0xff] %v87
    %v89 = vld [vmem:[#allocation3] sm:$0xff]
    %v90 = vadd.f32 %v79, %v80
    %v91 = vadd.f32 %v89, %v90
    %92 = vst [vmem:[#allocation3] sm:$0xff] %v91
    %v93 = vld [vmem:[#allocation4] sm:$0xff]
    %v94 = vadd.f32 %v81, %v82
    %v95 = vadd.f32 %v93, %v94
    %96 = vst [vmem:[#allocation4] sm:$0xff] %v95
    %v97 = vld [vmem:[#allocation5] sm:$0xff]
    %v98 = vadd.f32 %v83, %v84
    %v99 = vadd.f32 %v97, %v98
    %100 = vst [vmem:[#allocation5] sm:$0xff] %v99
    // Predicated region
    $region30: #{tpu_custom_call.1} parent=1 // pred_check
      %p101 = pneg %p59
    $region31: #{tpu_custom_call.1} parent=1 // pred_check_branch
      %103 = sbr.rel (%p101) target = $region33
    $region32: #{tpu_custom_call.1} parent=1 // pred_region
      %v104 = vld [vmem:[#allocation2] sm:$0xff]
      %105 = vadd.xlane.f32.xlu0 %v104
      %v106 = vpop.xlane.xlu0 %105
      %vm107 = vcmask 7168
      %108 = vst.msk [vmem:[%s3] sm:$0xff] %vm107, %v106
      %v109 = vld [vmem:[#allocation3] sm:$0xff]
      %110 = vadd.xlane.f32.xlu0 %v109
      %v111 = vpop.xlane.xlu0 %110
      %112 = vst.msk [vmem:[%s4] sm:$0xff] %vm107, %v111
      %v113 = vld [vmem:[#allocation4] sm:$0xff]
      %114 = vadd.xlane.f32.xlu0 %v113
      %v115 = vpop.xlane.xlu0 %114
      %116 = vst.msk [vmem:[%s5] sm:$0xff] %vm107, %v115
      %v117 = vld [vmem:[#allocation5] sm:$0xff]
      %118 = vadd.xlane.f32.xlu0 %v117
      %v119 = vpop.xlane.xlu0 %118
      %120 = vst.msk [vmem:[%s6] sm:$0xff] %vm107, %v119
    $region33: #{tpu_custom_call.1} parent=1 // pred_fallthru
      _
    // Predicated region
    $region34: #{tpu_custom_call.1} parent=1 // pred_check
      _
    $region35: #{tpu_custom_call.1} parent=1 // pred_check_branch
      %122 = sbr.rel (0) target = $region37
    $region36: #{tpu_custom_call.1} parent=1 // pred_region
      _
    $region37: #{tpu_custom_call.1} parent=1 // pred_fallthru
      _
    // Predicated region
    $region38: #{tpu_custom_call.1} parent=1 // pred_check
      _
    $region39: #{tpu_custom_call.1} parent=1 // pred_check_branch
      %124 = sbr.rel (0) target = $region41
    $region40: #{tpu_custom_call.1} parent=1 // pred_region
      _
    $region41: #{tpu_custom_call.1} parent=1 // pred_fallthru
      _
    // Predicated region
    $region42: #{tpu_custom_call.1} parent=1 // pred_check
      _
    $region43: #{tpu_custom_call.1} parent=1 // pred_check_branch
      %126 = sbr.rel (0) target = $region45
    $region44: #{tpu_custom_call.1} parent=1 // pred_region
      _
    $region45: #{tpu_custom_call.1} parent=1 // pred_fallthru
      _
    // Predicated region
    $region46: #{tpu_custom_call.1} parent=1 // pred_check
      _
    $region47: #{tpu_custom_call.1} parent=1 // pred_check_branch
      %128 = sbr.rel (0) target = $region49
    $region48: #{tpu_custom_call.1} parent=1 // pred_region
      _
    $region49: #{tpu_custom_call.1} parent=1 // pred_fallthru
      _
    // Predicated region
    $region50: #{tpu_custom_call.1} parent=1 // pred_check
      _
    $region51: #{tpu_custom_call.1} parent=1 // pred_check_branch
      %130 = sbr.rel (0) target = $region53
    $region52: #{tpu_custom_call.1} parent=1 // pred_region
      _
    $region53: #{tpu_custom_call.1} parent=1 // pred_fallthru
      _
    // Predicated region
    $region54: #{tpu_custom_call.1} parent=1 // pred_check
      _
    $region55: #{tpu_custom_call.1} parent=1 // pred_check_branch
      %132 = sbr.rel (0) target = $region57
    $region56: #{tpu_custom_call.1} parent=1 // pred_region
      _
    $region57: #{tpu_custom_call.1} parent=1 // pred_fallthru
      _
    // Predicated region
    $region58: #{tpu_custom_call.1} parent=1 // pred_check
      _
    $region59: #{tpu_custom_call.1} parent=1 // pred_check_branch
      %134 = sbr.rel (0) target = $region61
    $region60: #{tpu_custom_call.1} parent=1 // pred_region
      _
    $region61: #{tpu_custom_call.1} parent=1 // pred_fallthru
      _
    // Predicated region
    $region62: #{tpu_custom_call.1} parent=1 // pred_check
      _
    $region63: #{tpu_custom_call.1} parent=1 // pred_check_branch
      %136 = sbr.rel (0) target = $region65
    $region64: #{tpu_custom_call.1} parent=1 // pred_region
      _
    $region65: #{tpu_custom_call.1} parent=1 // pred_fallthru
      _
    %137 = vsyncpa [#allocation7], 1
    %138 = vsyncpa [#allocation9], 1

</llo_original>
